<compile_context>
chip_gen: v6e
topology: v6e:2x2x1
jax: 0.10.0
libtpu: 0.0.40
codegen_flags: <defaults>
</compile_context>

<pallas_src>
import jax
import jax.numpy as jnp
from jax.experimental import pallas as pl
from jax.experimental.pallas import tpu as pltpu

HID_S, HID1, HID2 = 64, 128, 64   # layer widths from CriticNetwork.createNetwork
OUT_PAD = 128                     # lane-dense q output width (cols 0/1 used, rest zero)


def _twin_critic_kernel(s_ref, a_ref,
                        ws_ref, bs_ref,
                        w1h_ref, w1a_ref, b1_ref,
                        w2_ref, b2_ref,
                        w3_ref, b3_ref,
                        out_ref):
    s = s_ref[...]                                            # (Bp, S)
    a = a_ref[...]                                            # (Bp, A)

    # h = relu(state @ [Ws1 | Ws2]) : columns 0..63 -> critic1 hidden, 64..127 -> critic2
    h = jnp.dot(s, ws_ref[...], preferred_element_type=jnp.float32) + bs_ref[...]
    h = jnp.maximum(h, 0.0)                                   # (Bp, 128)

    # fused fc1: block-diagonal hidden part + shared action part
    x = (jnp.dot(h, w1h_ref[...], preferred_element_type=jnp.float32)
         + jnp.dot(a, w1a_ref[...], preferred_element_type=jnp.float32)
         + b1_ref[...])
    x = jnp.maximum(x, 0.0)                                   # (Bp, 256)

    # fused fc2 (block-diagonal)
    x = jnp.dot(x, w2_ref[...], preferred_element_type=jnp.float32) + b2_ref[...]
    x = jnp.maximum(x, 0.0)                                   # (Bp, 128)

    # fused fc3: lane-dense (128, 128) weight; col 0 = q1, col 1 = q2, rest zero
    out_ref[...] = jnp.dot(x, w3_ref[...], preferred_element_type=jnp.float32) + b3_ref[...]


def twin_critic_forward(state, action, fused_params):
    """Returns (q1, q2), each of shape (B, 1) float32."""
    B = state.shape[0]
    Bp = ((B + 7) // 8) * 8                                   # pad batch to sublane multiple
    if Bp != B:
        pad = Bp - B
        state = jnp.pad(state, ((0, pad), (0, 0)))
        action = jnp.pad(action, ((0, pad), (0, 0)))

    vmem_spec = pl.BlockSpec(memory_space=pltpu.MemorySpace.VMEM)  # whole array, VMEM-resident

    out = pl.pallas_call(
        _twin_critic_kernel,
        out_shape=jax.ShapeDtypeStruct((Bp, OUT_PAD), jnp.float32),
        in_specs=[vmem_spec] * 11,
        out_specs=vmem_spec,
    )(state, action, *fused_params)

    return out[:B, 0:1], out[:B, 1:2]


# ---------------- parameter construction (plain JAX glue) ----------------

def _init_linear(key, fan_in, fan_out):
    """Deterministic PyTorch-nn.Linear-style init: U(-1/sqrt(fan_in), 1/sqrt(fan_in))."""
    kw, kb = jax.random.split(key)
    bound = 1.0 / (fan_in ** 0.5)
    w = jax.random.uniform(kw, (fan_out, fan_in), jnp.float32, -bound, bound)
    b = jax.random.uniform(kb, (fan_out,), jnp.float32, -bound, bound)
    return w, b


def init_critic_params(key, state_dim, action_dim):
    ks = jax.random.split(key, 4)
    ws, bs = _init_linear(ks[0], state_dim, HID_S)           # stateFullyConnected
    w1, b1 = _init_linear(ks[1], action_dim + HID_S, HID1)   # fc1
    w2, b2 = _init_linear(ks[2], HID1, HID2)                 # fc2
    w3, b3 = _init_linear(ks[3], HID2, 1)                    # fc3
    return dict(ws=ws, bs=bs, w1=w1, b1=b1, w2=w2, b2=b2, w3=w3, b3=b3)


def pack_twin_params(p1, p2):
    """Fuse the two critics into one wider set of (in, out)-layout matmul operands."""
    # state layer: concat along output dim -> (S, 128)
    ws_f = jnp.concatenate([p1["ws"].T, p2["ws"].T], axis=1)
    bs_f = jnp.concatenate([p1["bs"], p2["bs"]])[None, :]                  # (1, 128)

    # fc1: hidden part block-diagonal (128, 256); action part concatenated (A, 256)
    w1h_1 = p1["w1"][:, :HID_S].T                                          # (64, 128)
    w1h_2 = p2["w1"][:, :HID_S].T
    w1h_f = jnp.block([[w1h_1, jnp.zeros_like(w1h_1)],
                       [jnp.zeros_like(w1h_2), w1h_2]])                    # (128, 256)
    w1a_f = jnp.concatenate([p1["w1"][:, HID_S:].T,
                             p2["w1"][:, HID_S:].T], axis=1)               # (A, 256)
    b1_f = jnp.concatenate([p1["b1"], p2["b1"]])[None, :]                  # (1, 256)

    # fc2: block-diagonal (256, 128)
    w2_1 = p1["w2"].T                                                      # (128, 64)
    w2_2 = p2["w2"].T
    w2_f = jnp.block([[w2_1, jnp.zeros_like(w2_1)],
                      [jnp.zeros_like(w2_2), w2_2]])                       # (256, 128)
    b2_f = jnp.concatenate([p1["b2"], p2["b2"]])[None, :]                  # (1, 128)

    # fc3: lane-dense padded (128, 128); col 0 <- critic1, col 1 <- critic2
    w3_f = jnp.zeros((2 * HID2, OUT_PAD), jnp.float32)
    w3_f = w3_f.at[:HID2, 0].set(p1["w3"][0])
    w3_f = w3_f.at[HID2:, 1].set(p2["w3"][0])
    b3_f = jnp.zeros((1, OUT_PAD), jnp.float32)
    b3_f = b3_f.at[0, 0].set(p1["b3"][0])
    b3_f = b3_f.at[0, 1].set(p2["b3"][0])

    return (ws_f, bs_f, w1h_f, w1a_f, b1_f, w2_f, b2_f, w3_f, b3_f)


def critic_ref(state, action, p):
    """Pure-JAX reference matching the PyTorch forward exactly."""
    h = jax.nn.relu(state @ p["ws"].T + p["bs"])
    x = jnp.concatenate([h, action], axis=1)
    x = jax.nn.relu(x @ p["w1"].T + p["b1"])
    x = jax.nn.relu(x @ p["w2"].T + p["b2"])
    return x @ p["w3"].T + p["b3"]


if __name__ == "__main__":
    B, S, A = 4, 16, 8  # batch, stateDimension, actionDimension

    key = jax.random.PRNGKey(0)
    k_state, k_action, k_c1, k_c2 = jax.random.split(key, 4)
    state = jax.random.normal(k_state, (B, S), jnp.float32)
    action = jax.random.normal(k_action, (B, A), jnp.float32)

    p1 = init_critic_params(k_c1, S, A)
    p2 = init_critic_params(k_c2, S, A)
    fused = pack_twin_params(p1, p2)

    q1, q2 = twin_critic_forward(state, action, fused)
    jax.block_until_ready((q1, q2))

    r1 = critic_ref(state, action, p1)
    r2 = critic_ref(state, action, p2)
    assert q1.shape == (B, 1) and q2.shape == (B, 1)
    assert jnp.allclose(q1, r1, atol=1e-4, rtol=1e-4), "critic one mismatch"
    assert jnp.allclose(q2, r2, atol=1e-4, rtol=1e-4), "critic two mismatch"

    print("KERNEL_OK")
</pallas_src>

<mosaic_0001>
module attributes {stable_mosaic.version = 11 : i64} {
  func.func @_twin_critic_kernel(%arg0: memref<8x16xf32, #tpu.memory_space<vmem>>, %arg1: memref<8x8xf32, #tpu.memory_space<vmem>>, %arg2: memref<16x128xf32, #tpu.memory_space<vmem>>, %arg3: memref<1x128xf32, #tpu.memory_space<vmem>>, %arg4: memref<128x256xf32, #tpu.memory_space<vmem>>, %arg5: memref<8x256xf32, #tpu.memory_space<vmem>>, %arg6: memref<1x256xf32, #tpu.memory_space<vmem>>, %arg7: memref<256x128xf32, #tpu.memory_space<vmem>>, %arg8: memref<1x128xf32, #tpu.memory_space<vmem>>, %arg9: memref<128x128xf32, #tpu.memory_space<vmem>>, %arg10: memref<1x128xf32, #tpu.memory_space<vmem>>, %arg11: memref<8x128xf32, #tpu.memory_space<vmem>>) attributes {dimension_semantics = [], scalar_prefetch = 0 : i64, scratch_operands = 0 : i64, tpu.core_type = #tpu.core_type<tc>} {
    %c0 = arith.constant 0 : index
    %c0_0 = arith.constant 0 : index
    %0 = vector.load %arg0[%c0, %c0_0] : memref<8x16xf32, #tpu.memory_space<vmem>>, vector<8x16xf32>
    %c0_1 = arith.constant 0 : index
    %c0_2 = arith.constant 0 : index
    %1 = vector.load %arg1[%c0_1, %c0_2] : memref<8x8xf32, #tpu.memory_space<vmem>>, vector<8x8xf32>
    %c0_3 = arith.constant 0 : index
    %c0_4 = arith.constant 0 : index
    %2 = vector.load %arg2[%c0_3, %c0_4] : memref<16x128xf32, #tpu.memory_space<vmem>>, vector<16x128xf32>
    %cst = arith.constant dense<0.000000e+00> : vector<8x128xf32>
    %3 = tpu.matmul %0, %2, %cst {dimension_numbers = #tpu.dot_dimension_numbers<[1], [0], [0], [1], [0, 0, 1, 1], [], []>} : vector<8x16xf32>, vector<16x128xf32>, vector<8x128xf32> -> vector<8x128xf32>
    %c0_5 = arith.constant 0 : index
    %c0_6 = arith.constant 0 : index
    %4 = vector.load %arg3[%c0_5, %c0_6] : memref<1x128xf32, #tpu.memory_space<vmem>>, vector<1x128xf32>
    %5 = vector.broadcast %4 : vector<1x128xf32> to vector<8x128xf32>
    %6 = arith.addf %3, %5 : vector<8x128xf32>
    %cst_7 = arith.constant 0.000000e+00 : f32
    %7 = vector.broadcast %cst_7 : f32 to vector<8x128xf32>
    %8 = arith.maximumf %6, %7 : vector<8x128xf32>
    %c0_8 = arith.constant 0 : index
    %c0_9 = arith.constant 0 : index
    %9 = vector.load %arg4[%c0_8, %c0_9] : memref<128x256xf32, #tpu.memory_space<vmem>>, vector<128x256xf32>
    %cst_10 = arith.constant dense<0.000000e+00> : vector<8x256xf32>
    %10 = tpu.matmul %8, %9, %cst_10 {dimension_numbers = #tpu.dot_dimension_numbers<[1], [0], [0], [1], [0, 0, 1, 1], [], []>} : vector<8x128xf32>, vector<128x256xf32>, vector<8x256xf32> -> vector<8x256xf32>
    %c0_11 = arith.constant 0 : index
    %c0_12 = arith.constant 0 : index
    %11 = vector.load %arg5[%c0_11, %c0_12] : memref<8x256xf32, #tpu.memory_space<vmem>>, vector<8x256xf32>
    %cst_13 = arith.constant dense<0.000000e+00> : vector<8x256xf32>
    %12 = tpu.matmul %1, %11, %cst_13 {dimension_numbers = #tpu.dot_dimension_numbers<[1], [0], [0], [1], [0, 0, 1, 1], [], []>} : vector<8x8xf32>, vector<8x256xf32>, vector<8x256xf32> -> vector<8x256xf32>
    %13 = arith.addf %10, %12 : vector<8x256xf32>
    %c0_14 = arith.constant 0 : index
    %c0_15 = arith.constant 0 : index
    %14 = vector.load %arg6[%c0_14, %c0_15] : memref<1x256xf32, #tpu.memory_space<vmem>>, vector<1x256xf32>
    %15 = vector.broadcast %14 : vector<1x256xf32> to vector<8x256xf32>
    %16 = arith.addf %13, %15 : vector<8x256xf32>
    %cst_16 = arith.constant 0.000000e+00 : f32
    %17 = vector.broadcast %cst_16 : f32 to vector<8x256xf32>
    %18 = arith.maximumf %16, %17 : vector<8x256xf32>
    %c0_17 = arith.constant 0 : index
    %c0_18 = arith.constant 0 : index
    %19 = vector.load %arg7[%c0_17, %c0_18] : memref<256x128xf32, #tpu.memory_space<vmem>>, vector<256x128xf32>
    %cst_19 = arith.constant dense<0.000000e+00> : vector<8x128xf32>
    %20 = tpu.matmul %18, %19, %cst_19 {dimension_numbers = #tpu.dot_dimension_numbers<[1], [0], [0], [1], [0, 0, 1, 1], [], []>} : vector<8x256xf32>, vector<256x128xf32>, vector<8x128xf32> -> vector<8x128xf32>
    %c0_20 = arith.constant 0 : index
    %c0_21 = arith.constant 0 : index
    %21 = vector.load %arg8[%c0_20, %c0_21] : memref<1x128xf32, #tpu.memory_space<vmem>>, vector<1x128xf32>
    %22 = vector.broadcast %21 : vector<1x128xf32> to vector<8x128xf32>
    %23 = arith.addf %20, %22 : vector<8x128xf32>
    %cst_22 = arith.constant 0.000000e+00 : f32
    %24 = vector.broadcast %cst_22 : f32 to vector<8x128xf32>
    %25 = arith.maximumf %23, %24 : vector<8x128xf32>
    %c0_23 = arith.constant 0 : index
    %c0_24 = arith.constant 0 : index
    %26 = vector.load %arg9[%c0_23, %c0_24] : memref<128x128xf32, #tpu.memory_space<vmem>>, vector<128x128xf32>
    %cst_25 = arith.constant dense<0.000000e+00> : vector<8x128xf32>
    %27 = tpu.matmul %25, %26, %cst_25 {dimension_numbers = #tpu.dot_dimension_numbers<[1], [0], [0], [1], [0, 0, 1, 1], [], []>} : vector<8x128xf32>, vector<128x128xf32>, vector<8x128xf32> -> vector<8x128xf32>
    %c0_26 = arith.constant 0 : index
    %c0_27 = arith.constant 0 : index
    %28 = vector.load %arg10[%c0_26, %c0_27] : memref<1x128xf32, #tpu.memory_space<vmem>>, vector<1x128xf32>
    %29 = vector.broadcast %28 : vector<1x128xf32> to vector<8x128xf32>
    %30 = arith.addf %27, %29 : vector<8x128xf32>
    %c0_28 = arith.constant 0 : index
    %c0_29 = arith.constant 0 : index
    %31 = vector.load %arg11[%c0_28, %c0_29] : memref<8x128xf32, #tpu.memory_space<vmem>>, vector<8x128xf32>
    tpu.vector_store %arg11[%c0_28, %c0_29], %30 {strides = array<i32>} : memref<8x128xf32, #tpu.memory_space<vmem>>, vector<8x128xf32>,
    return
  }
}

</mosaic_0001>

<llo_original>
// kernel: tpu_custom_call.1
$region0: #{tpu_custom_call.1}
  #allocation0 [shape = 'u32[]', space=smem, size = 0x4, offset = 0x4, fixed_abs, tag = 'smem constant byte address 0x4 - core index']
  #allocation1 [shape = 'u32[144,128]{1,0:T(1,128)}', space=vmem, size = 0x12000, scoped, tag = 'internal scratch']
  %s0 = inlined_call_operand.hbm [shape: f32[8,16], index: 0, kind: input, shape index: {}]
  %s1 = inlined_call_operand.hbm [shape: f32[8,8], index: 1, kind: input, shape index: {}]
  %s2 = inlined_call_operand.hbm [shape: f32[16,128], index: 2, kind: input, shape index: {}]
  %s3 = inlined_call_operand.vmem [shape: f32[1,128], index: 3, kind: input, shape index: {}]
  %s4 = inlined_call_operand.hbm [shape: f32[128,256], index: 4, kind: input, shape index: {}]
  %s5 = inlined_call_operand.hbm [shape: f32[8,256], index: 5, kind: input, shape index: {}]
  %s6 = inlined_call_operand.vmem [shape: f32[1,256], index: 6, kind: input, shape index: {}]
  %s7 = inlined_call_operand.hbm [shape: f32[256,128], index: 7, kind: input, shape index: {}]
  %s8 = inlined_call_operand.vmem [shape: f32[1,128], index: 8, kind: input, shape index: {}]
  %s9 = inlined_call_operand.hbm [shape: f32[128,128], index: 9, kind: input, shape index: {}]
  %s10 = inlined_call_operand.vmem [shape: f32[1,128], index: 10, kind: input, shape index: {}]
  %s11 = inlined_call_operand.hbm [shape: f32[8,128], index: 11, kind: output, shape index: {}]
  %s12 = sld [smem:[#allocation0]]
  $region82: #{tpu_custom_call.1} parent=0
    _
  %s14 = ssub.s32 1, %s12
  %s15 = scalar_select 0, %s14, %s12
  $region1: #{tpu_custom_call.1} parent=0
    #allocation2 [shape = 'u8[4096]{0}', space=vmem, size = 0x1000, scoped, tag = 'input window, operand 0, single buffered']
    #allocation3 [shape = 's32[1]{0}', space=sflag, size = 0x4, scoped, tag = 'scoped memory for tpu_custom_call.1']
    #allocation4 [shape = 's32[1]{0}', space=sflag, size = 0x4, scoped, tag = 'scoped memory for tpu_custom_call.1']
    #allocation5 [shape = 'u8[4096]{0}', space=vmem, size = 0x1000, scoped, tag = 'input window, operand 1, single buffered']
    #allocation6 [shape = 's32[1]{0}', space=sflag, size = 0x4, scoped, tag = 'scoped memory for tpu_custom_call.1']
    #allocation7 [shape = 'u8[8192]{0}', space=vmem, size = 0x2000, scoped, tag = 'input window, operand 2, single buffered']
    #allocation8 [shape = 'u8[131072]{0}', space=vmem, size = 0x20000, scoped, tag = 'input window, operand 4, single buffered']
    #allocation9 [shape = 's32[1]{0}', space=sflag, size = 0x4, scoped, tag = 'scoped memory for tpu_custom_call.1']
    #allocation10 [shape = 'u8[8192]{0}', space=vmem, size = 0x2000, scoped, tag = 'input window, operand 5, single buffered']
    #allocation11 [shape = 'u8[131072]{0}', space=vmem, size = 0x20000, scoped, tag = 'input window, operand 7, single buffered']
    #allocation12 [shape = 's32[1]{0}', space=sflag, size = 0x4, scoped, tag = 'scoped memory for tpu_custom_call.1']
    #allocation13 [shape = 'u8[65536]{0}', space=vmem, size = 0x10000, scoped, tag = 'input window, operand 9, single buffered']
    #allocation14 [shape = 'u8[4096]{0}', space=vmem, size = 0x1000, scoped, tag = 'output window, operand 0, single buffered']
    %16 = vsyncpa [#allocation3], 0
    %17 = vsyncpa [#allocation6], 0
    %18 = vsyncpa [#allocation9], 0
    %19 = vsyncpa [#allocation12], 0
    %20 = vsyncpa [#allocation4], 0
    // Predicated region
    $region2: #{tpu_custom_call.1} parent=1 // pred_check
      _
    $region3: #{tpu_custom_call.1} parent=1 // pred_check_branch
      %22 = sbr.rel (0) target = $region5
    $region4: #{tpu_custom_call.1} parent=1 // pred_region
      %s24 = ssub.s32 128, 128
      %25 = vsyncadd [#allocation3], %s24
      %s27 = sshll.u32 [#allocation2], 4
      %s28 = int_to_ptr.vmem [resolvable:$true] %s27
      %30 = dma.hbm_to_vmem [thread:$0]  %s0, 128, %s28, [#allocation3]
    $region5: #{tpu_custom_call.1} parent=1 // pred_fallthru
      _
    // Predicated region
    $region6: #{tpu_custom_call.1} parent=1 // pred_check
      _
    $region7: #{tpu_custom_call.1} parent=1 // pred_check_branch
      %32 = sbr.rel (0) target = $region9
    $region8: #{tpu_custom_call.1} parent=1 // pred_region
      %s34 = ssub.s32 128, 128
      %35 = vsyncadd [#allocation6], %s34
      %s37 = sshll.u32 [#allocation5], 4
      %s38 = int_to_ptr.vmem [resolvable:$true] %s37
      %40 = dma.hbm_to_vmem [thread:$0]  %s1, 128, %s38, [#allocation6]
    $region9: #{tpu_custom_call.1} parent=1 // pred_fallthru
      _
    // Predicated region
    $region10: #{tpu_custom_call.1} parent=1 // pred_check
      _
    $region11: #{tpu_custom_call.1} parent=1 // pred_check_branch
      %42 = sbr.rel (0) target = $region13
    $region12: #{tpu_custom_call.1} parent=1 // pred_region
      %s44 = ssub.s32 256, 256
      %45 = vsyncadd [#allocation6], %s44
      %s46 = sshll.u32 [#allocation7], 4
      %s47 = int_to_ptr.vmem [resolvable:$true] %s46
      %52 = dma.hbm_to_vmem [thread:$0]  %s2, 256, %s47, [#allocation6], 128, 128, 8
    $region13: #{tpu_custom_call.1} parent=1 // pred_fallthru
      _
    // Predicated region
    $region14: #{tpu_custom_call.1} parent=1 // pred_check
      _
    $region15: #{tpu_custom_call.1} parent=1 // pred_check_branch
      %54 = sbr.rel (0) target = $region17
    $region16: #{tpu_custom_call.1} parent=1 // pred_region
      _
    $region17: #{tpu_custom_call.1} parent=1 // pred_fallthru
      _
    // Predicated region
    $region18: #{tpu_custom_call.1} parent=1 // pred_check
      _
    $region19: #{tpu_custom_call.1} parent=1 // pred_check_branch
      %56 = sbr.rel (0) target = $region21
    $region20: #{tpu_custom_call.1} parent=1 // pred_region
      %s58 = ssub.s32 4096, 4096
      %59 = vsyncadd [#allocation9], %s58
      %s60 = sshll.u32 [#allocation8], 4
      %s61 = int_to_ptr.vmem [resolvable:$true] %s60
      %66 = dma.hbm_to_vmem [thread:$0]  %s4, 4096, %s61, [#allocation9], 256, 256, 16
    $region21: #{tpu_custom_call.1} parent=1 // pred_fallthru
      _
    // Predicated region
    $region22: #{tpu_custom_call.1} parent=1 // pred_check
      _
    $region23: #{tpu_custom_call.1} parent=1 // pred_check_branch
      %68 = sbr.rel (0) target = $region25
    $region24: #{tpu_custom_call.1} parent=1 // pred_region
      %s70 = ssub.s32 256, 256
      %71 = vsyncadd [#allocation9], %s70
      %s73 = sshll.u32 [#allocation10], 4
      %s74 = int_to_ptr.vmem [resolvable:$true] %s73
      %76 = dma.hbm_to_vmem [thread:$0]  %s5, 256, %s74, [#allocation9]
    $region25: #{tpu_custom_call.1} parent=1 // pred_fallthru
      _
    // Predicated region
    $region26: #{tpu_custom_call.1} parent=1 // pred_check
      _
    $region27: #{tpu_custom_call.1} parent=1 // pred_check_branch
      %78 = sbr.rel (0) target = $region29
    $region28: #{tpu_custom_call.1} parent=1 // pred_region
      _
    $region29: #{tpu_custom_call.1} parent=1 // pred_fallthru
      _
    // Predicated region
    $region30: #{tpu_custom_call.1} parent=1 // pred_check
      _
    $region31: #{tpu_custom_call.1} parent=1 // pred_check_branch
      %80 = sbr.rel (0) target = $region33
    $region32: #{tpu_custom_call.1} parent=1 // pred_region
      %s82 = ssub.s32 4096, 4096
      %83 = vsyncadd [#allocation12], %s82
      %s84 = sshll.u32 [#allocation11], 4
      %s85 = int_to_ptr.vmem [resolvable:$true] %s84
      %90 = dma.hbm_to_vmem [thread:$0]  %s7, 4096, %s85, [#allocation12], 128, 128, 8
    $region33: #{tpu_custom_call.1} parent=1 // pred_fallthru
      _
    // Predicated region
    $region34: #{tpu_custom_call.1} parent=1 // pred_check
      _
    $region35: #{tpu_custom_call.1} parent=1 // pred_check_branch
      %92 = sbr.rel (0) target = $region37
    $region36: #{tpu_custom_call.1} parent=1 // pred_region
      _
    $region37: #{tpu_custom_call.1} parent=1 // pred_fallthru
      _
    // Predicated region
    $region38: #{tpu_custom_call.1} parent=1 // pred_check
      _
    $region39: #{tpu_custom_call.1} parent=1 // pred_check_branch
      %94 = sbr.rel (0) target = $region41
    $region40: #{tpu_custom_call.1} parent=1 // pred_region
      %s96 = ssub.s32 2048, 2048
      %97 = vsyncadd [#allocation12], %s96
      %s98 = sshll.u32 [#allocation13], 4
      %s99 = int_to_ptr.vmem [resolvable:$true] %s98
      %104 = dma.hbm_to_vmem [thread:$0]  %s9, 2048, %s99, [#allocation12], 128, 128, 8
    $region41: #{tpu_custom_call.1} parent=1 // pred_fallthru
      _
    // Predicated region
    $region42: #{tpu_custom_call.1} parent=1 // pred_check
      _
    $region43: #{tpu_custom_call.1} parent=1 // pred_check_branch
      %106 = sbr.rel (0) target = $region45
    $region44: #{tpu_custom_call.1} parent=1 // pred_region
      _
    $region45: #{tpu_custom_call.1} parent=1 // pred_fallthru
      _
    // Predicated region
    $region46: #{tpu_custom_call.1} parent=1 // pred_check
      _
    $region47: #{tpu_custom_call.1} parent=1 // pred_check_branch
      %108 = sbr.rel (0) target = $region49
    $region48: #{tpu_custom_call.1} parent=1 // pred_region
      %109 = dma.done [#allocation3], 128
    $region49: #{tpu_custom_call.1} parent=1 // pred_fallthru
      _
    // Predicated region
    $region50: #{tpu_custom_call.1} parent=1 // pred_check
      _
    $region51: #{tpu_custom_call.1} parent=1 // pred_check_branch
      %111 = sbr.rel (0) target = $region53
    $region52: #{tpu_custom_call.1} parent=1 // pred_region
      %112 = dma.done [#allocation6], 128
    $region53: #{tpu_custom_call.1} parent=1 // pred_fallthru
      _
    // Predicated region
    $region54: #{tpu_custom_call.1} parent=1 // pred_check
      _
    $region55: #{tpu_custom_call.1} parent=1 // pred_check_branch
      %114 = sbr.rel (0) target = $region57
    $region56: #{tpu_custom_call.1} parent=1 // pred_region
      %115 = dma.done [#allocation6], 256
    $region57: #{tpu_custom_call.1} parent=1 // pred_fallthru
      _
    // Predicated region
    $region58: #{tpu_custom_call.1} parent=1 // pred_check
      _
    $region59: #{tpu_custom_call.1} parent=1 // pred_check_branch
      %117 = sbr.rel (0) target = $region61
    $region60: #{tpu_custom_call.1} parent=1 // pred_region
      %118 = dma.done [#allocation9], 4096
    $region61: #{tpu_custom_call.1} parent=1 // pred_fallthru
      _
    // Predicated region
    $region62: #{tpu_custom_call.1} parent=1 // pred_check
      _
    $region63: #{tpu_custom_call.1} parent=1 // pred_check_branch
      %120 = sbr.rel (0) target = $region65
    $region64: #{tpu_custom_call.1} parent=1 // pred_region
      %121 = dma.done [#allocation9], 256
    $region65: #{tpu_custom_call.1} parent=1 // pred_fallthru
      _
    // Predicated region
    $region66: #{tpu_custom_call.1} parent=1 // pred_check
      _
    $region67: #{tpu_custom_call.1} parent=1 // pred_check_branch
      %123 = sbr.rel (0) target = $region69
    $region68: #{tpu_custom_call.1} parent=1 // pred_region
      %124 = dma.done [#allocation12], 4096
    $region69: #{tpu_custom_call.1} parent=1 // pred_fallthru
      _
    // Predicated region
    $region70: #{tpu_custom_call.1} parent=1 // pred_check
      _
    $region71: #{tpu_custom_call.1} parent=1 // pred_check_branch
      %126 = sbr.rel (0) target = $region73
    $region72: #{tpu_custom_call.1} parent=1 // pred_region
      %127 = dma.done [#allocation12], 2048
    $region73: #{tpu_custom_call.1} parent=1 // pred_fallthru
      _
    %v128 = vld [vmem:[#allocation2] sm:$0xff]
    %v129 = vld [vmem:[#allocation5] sm:$0xff]
    %v130 = vld [vmem:[#allocation7] sm:$0xff]
    %v131 = vld [vmem:[#allocation7 + $0x8] sm:$0xff]
    %v132 = vld [vmem:[%s3] sm:$0x1]
    %v134 = vlaneseq
    %v135 = vshrl.u32 %v134, 7
    %v136 = vsub.s32 0, %v135
    %v137 = vrot.slane %v132, %v136
    %vm139 = vcmask 130048
    %v141 = vsel %vm139, %v128, 0
    %143 = vmatprep.subr.mxu0 0.0
    %144 = vmatpush1.msra.mxu0 0.0
    %145 = vmatprep.subr.mxu0 0.0
    %146 = vmatpush1.msra.mxu0 0.0
    %147 = vmatprep.subr.mxu0 0.0
    %148 = vmatpush1.msra.mxu0 0.0
    %149 = vmatprep.subr.mxu0 0.0
    %150 = vmatpush1.msra.mxu0 0.0
    %151 = vmatprep.subr.mxu0 0.0
    %152 = vmatpush1.msra.mxu0 0.0
    %153 = vmatprep.subr.mxu0 0.0
    %154 = vmatpush1.msra.mxu0 0.0
    %155 = vmatprep.subr.mxu0 0.0
    %156 = vmatpush1.msra.mxu0 0.0
    %157 = vmatprep.subr.mxu0 0.0
    %158 = vmatpush1.msra.mxu0 0.0
    %159 = vmatprep.subr.mxu0 0.0
    %160 = vmatpush1.msra.mxu0 0.0
    %161 = vmatprep.subr.mxu0 0.0
    %162 = vmatpush1.msra.mxu0 0.0
    %163 = vmatprep.subr.mxu0 0.0
    %164 = vmatpush1.msra.mxu0 0.0
    %165 = vmatprep.subr.mxu0 0.0
    %166 = vmatpush1.msra.mxu0 0.0
    %167 = vmatprep.subr.mxu0 0.0
    %168 = vmatpush1.msra.mxu0 0.0
    %169 = vmatprep.subr.mxu0 0.0
    %170 = vmatpush1.msra.mxu0 0.0
    %171 = vmatprep.subr.mxu0 0.0
    %172 = vmatpush1.msra.mxu0 %v131
    %173 = vmatprep.subr.mxu0 0.0
    %174 = vmatpush1.msra.mxu0 %v130
    %175 = vmatprep.subr.mxu0 0.0
    %176 = vmatpush2.msra.mxu0 0.0
    %177 = vmatprep.subr.mxu0 0.0
    %178 = vmatpush2.msra.mxu0 0.0
    %179 = vmatprep.subr.mxu0 0.0
    %180 = vmatpush2.msra.mxu0 0.0
    %181 = vmatprep.subr.mxu0 0.0
    %182 = vmatpush2.msra.mxu0 0.0
    %183 = vmatprep.subr.mxu0 0.0
    %184 = vmatpush2.msra.mxu0 0.0
    %185 = vmatprep.subr.mxu0 0.0
    %186 = vmatpush2.msra.mxu0 0.0
    %187 = vmatprep.subr.mxu0 0.0
    %188 = vmatpush2.msra.mxu0 0.0
    %189 = vmatprep.subr.mxu0 0.0
    %190 = vmatpush2.msra.mxu0 0.0
    %191 = vmatprep.subr.mxu0 0.0
    %192 = vmatpush2.msra.mxu0 0.0
    %193 = vmatprep.subr.mxu0 0.0
    %194 = vmatpush2.msra.mxu0 0.0
    %195 = vmatprep.subr.mxu0 0.0
    %196 = vmatpush2.msra.mxu0 0.0
    %197 = vmatprep.subr.mxu0 0.0
    %198 = vmatpush2.msra.mxu0 0.0
    %199 = vmatprep.subr.mxu0 0.0
    %200 = vmatpush2.msra.mxu0 0.0
    %201 = vmatprep.subr.mxu0 0.0
    %202 = vmatpush2.msra.mxu0 0.0
    %203 = vmatprep.subr.mxu0 0.0
    %204 = vmatpush2.msra.mxu0 0.0
    %205 = vmatprep.subr.mxu0 0.0
    %206 = vmatpush2.msra.mxu0 0.0
    %207 = vmatprep.mubr.f32.mxu0 0.0
    %208 = vmatmul.mubr.f32.gmra.mxu0 %v141
    %v209 = vpop.f32.mrf.mxu0
    %v210 = vadd.f32 %v137, %v209
    %v211 = vpop.f32.mrf.mxu0
    %212 = vdwg.mxu0
    %v213 = vmax.f32 %v210, 0.0
    %v214 = vld [vmem:[#allocation8] sm:$0xff]
    %v215 = vld [vmem:[#allocation8 + $0x8] sm:$0xff]
    %v216 = vld [vmem:[#allocation8 + $0x10] sm:$0xff]
    %v217 = vld [vmem:[#allocation8 + $0x18] sm:$0xff]
    %v218 = vld [vmem:[#allocation8 + $0x20] sm:$0xff]
    %v219 = vld [vmem:[#allocation8 + $0x28] sm:$0xff]
    %v220 = vld [vmem:[#allocation8 + $0x30] sm:$0xff]
    %v221 = vld [vmem:[#allocation8 + $0x38] sm:$0xff]
    %v222 = vld [vmem:[#allocation8 + $0x40] sm:$0xff]
    %v223 = vld [vmem:[#allocation8 + $0x48] sm:$0xff]
    %v224 = vld [vmem:[#allocation8 + $0x50] sm:$0xff]
    %v225 = vld [vmem:[#allocation8 + $0x58] sm:$0xff]
    %v226 = vld [vmem:[#allocation8 + $0x60] sm:$0xff]
    %v227 = vld [vmem:[#allocation8 + $0x68] sm:$0xff]
    %v228 = vld [vmem:[#allocation8 + $0x70] sm:$0xff]
    %v229 = vld [vmem:[#allocation8 + $0x78] sm:$0xff]
    %v230 = vld [vmem:[#allocation8 + $0x80] sm:$0xff]
    %v231 = vld [vmem:[#allocation8 + $0x88] sm:$0xff]
    %v232 = vld [vmem:[#allocation8 + $0x90] sm:$0xff]
    %v233 = vld [vmem:[#allocation8 + $0x98] sm:$0xff]
    %v234 = vld [vmem:[#allocation8 + $0xa0] sm:$0xff]
    %v235 = vld [vmem:[#allocation8 + $0xa8] sm:$0xff]
    %v236 = vld [vmem:[#allocation8 + $0xb0] sm:$0xff]
    %v237 = vld [vmem:[#allocation8 + $0xb8] sm:$0xff]
    %v238 = vld [vmem:[#allocation8 + $0xc0] sm:$0xff]
    %v239 = vld [vmem:[#allocation8 + $0xc8] sm:$0xff]
    %v240 = vld [vmem:[#allocation8 + $0xd0] sm:$0xff]
    %v241 = vld [vmem:[#allocation8 + $0xd8] sm:$0xff]
    %v242 = vld [vmem:[#allocation8 + $0xe0] sm:$0xff]
    %v243 = vld [vmem:[#allocation8 + $0xe8] sm:$0xff]
    %v244 = vld [vmem:[#allocation8 + $0xf0] sm:$0xff]
    %v245 = vld [vmem:[#allocation8 + $0xf8] sm:$0xff]
    %v246 = vld [vmem:[#allocation10] sm:$0xff]
    %v247 = vld [vmem:[#allocation10 + $0x8] sm:$0xff]
    %vm248 = vcmask 64512
    %v250 = vsel %vm248, %v129, 0
    %252 = vmatprep.subr.mxu0 0.0
    %253 = vmatpush1.msra.mxu0 0.0
    %254 = vmatprep.subr.mxu0 0.0
    %255 = vmatpush1.msra.mxu0 0.0
    %256 = vmatprep.subr.mxu0 0.0
    %257 = vmatpush1.msra.mxu0 0.0
    %258 = vmatprep.subr.mxu0 0.0
    %259 = vmatpush1.msra.mxu0 0.0
    %260 = vmatprep.subr.mxu0 0.0
    %261 = vmatpush1.msra.mxu0 0.0
    %262 = vmatprep.subr.mxu0 0.0
    %263 = vmatpush1.msra.mxu0 0.0
    %264 = vmatprep.subr.mxu0 0.0
    %265 = vmatpush1.msra.mxu0 0.0
    %266 = vmatprep.subr.mxu0 0.0
    %267 = vmatpush1.msra.mxu0 0.0
    %268 = vmatprep.subr.mxu0 0.0
    %269 = vmatpush1.msra.mxu0 0.0
    %270 = vmatprep.subr.mxu0 0.0
    %271 = vmatpush1.msra.mxu0 0.0
    %272 = vmatprep.subr.mxu0 0.0
    %273 = vmatpush1.msra.mxu0 0.0
    %274 = vmatprep.subr.mxu0 0.0
    %275 = vmatpush1.msra.mxu0 0.0
    %276 = vmatprep.subr.mxu0 0.0
    %277 = vmatpush1.msra.mxu0 0.0
    %278 = vmatprep.subr.mxu0 0.0
    %279 = vmatpush1.msra.mxu0 0.0
    %280 = vmatprep.subr.mxu0 0.0
    %281 = vmatpush1.msra.mxu0 0.0
    %282 = vmatprep.subr.mxu0 %v247
    %283 = vmatpush1.msra.mxu0 %v246
    %284 = vmatprep.subr.mxu0 0.0
    %285 = vmatpush2.msra.mxu0 0.0
    %286 = vmatprep.subr.mxu0 0.0
    %287 = vmatpush2.msra.mxu0 0.0
    %288 = vmatprep.subr.mxu0 0.0
    %289 = vmatpush2.msra.mxu0 0.0
    %290 = vmatprep.subr.mxu0 0.0
    %291 = vmatpush2.msra.mxu0 0.0
    %292 = vmatprep.subr.mxu0 0.0
    %293 = vmatpush2.msra.mxu0 0.0
    %294 = vmatprep.subr.mxu0 0.0
    %295 = vmatpush2.msra.mxu0 0.0
    %296 = vmatprep.subr.mxu0 0.0
    %297 = vmatpush2.msra.mxu0 0.0
    %298 = vmatprep.subr.mxu0 0.0
    %299 = vmatpush2.msra.mxu0 0.0
    %300 = vmatprep.subr.mxu0 0.0
    %301 = vmatpush2.msra.mxu0 0.0
    %302 = vmatprep.subr.mxu0 0.0
    %303 = vmatpush2.msra.mxu0 0.0
    %304 = vmatprep.subr.mxu0 0.0
    %305 = vmatpush2.msra.mxu0 0.0
    %306 = vmatprep.subr.mxu0 0.0
    %307 = vmatpush2.msra.mxu0 0.0
    %308 = vmatprep.subr.mxu0 0.0
    %309 = vmatpush2.msra.mxu0 0.0
    %310 = vmatprep.subr.mxu0 0.0
    %311 = vmatpush2.msra.mxu0 0.0
    %312 = vmatprep.subr.mxu0 0.0
    %313 = vmatpush2.msra.mxu0 0.0
    %314 = vmatprep.subr.mxu0 0.0
    %315 = vmatpush2.msra.mxu0 0.0
    %316 = vmatprep.mubr.f32.mxu0 0.0
    %317 = vmatmul.mubr.f32.gmra.mxu0 %v250
    %v318 = vpop.f32.mrf.mxu0
    %v319 = vadd.f32 0.0, %v318
    %v320 = vpop.f32.mrf.mxu0
    %v321 = vadd.f32 0.0, %v320
    %322 = vdwg.mxu0
    %323 = vmatprep.subr.mxu0 %v245
    %324 = vmatpush1.msra.mxu0 %v244
    %325 = vmatprep.subr.mxu0 %v243
    %326 = vmatpush1.msra.mxu0 %v242
    %327 = vmatprep.subr.mxu0 %v241
    %328 = vmatpush1.msra.mxu0 %v240
    %329 = vmatprep.subr.mxu0 %v239
    %330 = vmatpush1.msra.mxu0 %v238
    %331 = vmatprep.subr.mxu0 %v237
    %332 = vmatpush1.msra.mxu0 %v236
    %333 = vmatprep.subr.mxu0 %v235
    %334 = vmatpush1.msra.mxu0 %v234
    %335 = vmatprep.subr.mxu0 %v233
    %336 = vmatpush1.msra.mxu0 %v232
    %337 = vmatprep.subr.mxu0 %v231
    %338 = vmatpush1.msra.mxu0 %v230
    %339 = vmatprep.subr.mxu0 %v229
    %340 = vmatpush1.msra.mxu0 %v228
    %341 = vmatprep.subr.mxu0 %v227
    %342 = vmatpush1.msra.mxu0 %v226
    %343 = vmatprep.subr.mxu0 %v225
    %344 = vmatpush1.msra.mxu0 %v224
    %345 = vmatprep.subr.mxu0 %v223
    %346 = vmatpush1.msra.mxu0 %v222
    %347 = vmatprep.subr.mxu0 %v221
    %348 = vmatpush1.msra.mxu0 %v220
    %349 = vmatprep.subr.mxu0 %v219
    %350 = vmatpush1.msra.mxu0 %v218
    %351 = vmatprep.subr.mxu0 %v217
    %352 = vmatpush1.msra.mxu0 %v216
    %353 = vmatprep.subr.mxu0 %v215
    %354 = vmatpush1.msra.mxu0 %v214
    %355 = vmatprep.subr.mxu0 0.0
    %356 = vmatpush2.msra.mxu0 0.0
    %357 = vmatprep.subr.mxu0 0.0
    %358 = vmatpush2.msra.mxu0 0.0
    %359 = vmatprep.subr.mxu0 0.0
    %360 = vmatpush2.msra.mxu0 0.0
    %361 = vmatprep.subr.mxu0 0.0
    %362 = vmatpush2.msra.mxu0 0.0
    %363 = vmatprep.subr.mxu0 0.0
    %364 = vmatpush2.msra.mxu0 0.0
    %365 = vmatprep.subr.mxu0 0.0
    %366 = vmatpush2.msra.mxu0 0.0
    %367 = vmatprep.subr.mxu0 0.0
    %368 = vmatpush2.msra.mxu0 0.0
    %369 = vmatprep.subr.mxu0 0.0
    %370 = vmatpush2.msra.mxu0 0.0
    %371 = vmatprep.subr.mxu0 0.0
    %372 = vmatpush2.msra.mxu0 0.0
    %373 = vmatprep.subr.mxu0 0.0
    %374 = vmatpush2.msra.mxu0 0.0
    %375 = vmatprep.subr.mxu0 0.0
    %376 = vmatpush2.msra.mxu0 0.0
    %377 = vmatprep.subr.mxu0 0.0
    %378 = vmatpush2.msra.mxu0 0.0
    %379 = vmatprep.subr.mxu0 0.0
    %380 = vmatpush2.msra.mxu0 0.0
    %381 = vmatprep.subr.mxu0 0.0
    %382 = vmatpush2.msra.mxu0 0.0
    %383 = vmatprep.subr.mxu0 0.0
    %384 = vmatpush2.msra.mxu0 0.0
    %385 = vmatprep.subr.mxu0 0.0
    %386 = vmatpush2.msra.mxu0 0.0
    %387 = vmatprep.mubr.f32.mxu0 0.0
    %388 = vmatmul.mubr.f32.gmra.mxu0 %v213
    %v389 = vpop.f32.mrf.mxu0
    %v390 = vadd.f32 %v319, %v389
    %v391 = vpop.f32.mrf.mxu0
    %v392 = vadd.f32 %v321, %v391
    %393 = vdwg.mxu0
    %v394 = vld [vmem:[%s6] sm:$0x3]
    %v396 = vlaneseq
    %v397 = vshrl.u32 %v396, 7
    %v398 = vsub.s32 0, %v397
    %v399 = vrot.slane %v394, %v398
    %v400 = vlaneseq
    %v401 = vshrl.u32 %v400, 7
    %v402 = vsub.s32 1, %v401
    %v403 = vrot.slane %v394, %v402
    %v406 = vadd.f32 %v390, %v399
    %v407 = vadd.f32 %v392, %v403
    %v408 = vmax.f32 %v406, 0.0
    %v409 = vmax.f32 %v407, 0.0
    %v410 = vld [vmem:[#allocation11] sm:$0xff]
    %v411 = vld [vmem:[#allocation11 + $0x8] sm:$0xff]
    %v412 = vld [vmem:[#allocation11 + $0x10] sm:$0xff]
    %v413 = vld [vmem:[#allocation11 + $0x18] sm:$0xff]
    %v414 = vld [vmem:[#allocation11 + $0x20] sm:$0xff]
    %v415 = vld [vmem:[#allocation11 + $0x28] sm:$0xff]
    %v416 = vld [vmem:[#allocation11 + $0x30] sm:$0xff]
    %v417 = vld [vmem:[#allocation11 + $0x38] sm:$0xff]
    %v418 = vld [vmem:[#allocation11 + $0x40] sm:$0xff]
    %v419 = vld [vmem:[#allocation11 + $0x48] sm:$0xff]
    %v420 = vld [vmem:[#allocation11 + $0x50] sm:$0xff]
    %v421 = vld [vmem:[#allocation11 + $0x58] sm:$0xff]
    %v422 = vld [vmem:[#allocation11 + $0x60] sm:$0xff]
    %v423 = vld [vmem:[#allocation11 + $0x68] sm:$0xff]
    %v424 = vld [vmem:[#allocation11 + $0x70] sm:$0xff]
    %v425 = vld [vmem:[#allocation11 + $0x78] sm:$0xff]
    %v426 = vld [vmem:[#allocation11 + $0x80] sm:$0xff]
    %v427 = vld [vmem:[#allocation11 + $0x88] sm:$0xff]
    %v428 = vld [vmem:[#allocation11 + $0x90] sm:$0xff]
    %v429 = vld [vmem:[#allocation11 + $0x98] sm:$0xff]
    %v430 = vld [vmem:[#allocation11 + $0xa0] sm:$0xff]
    %v431 = vld [vmem:[#allocation11 + $0xa8] sm:$0xff]
    %v432 = vld [vmem:[#allocation11 + $0xb0] sm:$0xff]
    %v433 = vld [vmem:[#allocation11 + $0xb8] sm:$0xff]
    %v434 = vld [vmem:[#allocation11 + $0xc0] sm:$0xff]
    %v435 = vld [vmem:[#allocation11 + $0xc8] sm:$0xff]
    %v436 = vld [vmem:[#allocation11 + $0xd0] sm:$0xff]
    %v437 = vld [vmem:[#allocation11 + $0xd8] sm:$0xff]
    %v438 = vld [vmem:[#allocation11 + $0xe0] sm:$0xff]
    %v439 = vld [vmem:[#allocation11 + $0xe8] sm:$0xff]
    %v440 = vld [vmem:[#allocation11 + $0xf0] sm:$0xff]
    %v441 = vld [vmem:[#allocation11 + $0xf8] sm:$0xff]
    %v442 = vld [vmem:[%s8] sm:$0x1]
    %v444 = vlaneseq
    %v445 = vshrl.u32 %v444, 7
    %v446 = vsub.s32 0, %v445
    %v447 = vrot.slane %v442, %v446
    %449 = vmatprep.subr.mxu0 0.0
    %450 = vmatpush1.msra.mxu0 %v425
    %451 = vmatprep.subr.mxu0 0.0
    %452 = vmatpush1.msra.mxu0 %v424
    %453 = vmatprep.subr.mxu0 0.0
    %454 = vmatpush1.msra.mxu0 %v423
    %455 = vmatprep.subr.mxu0 0.0
    %456 = vmatpush1.msra.mxu0 %v422
    %457 = vmatprep.subr.mxu0 0.0
    %458 = vmatpush1.msra.mxu0 %v421
    %459 = vmatprep.subr.mxu0 0.0
    %460 = vmatpush1.msra.mxu0 %v420
    %461 = vmatprep.subr.mxu0 0.0
    %462 = vmatpush1.msra.mxu0 %v419
    %463 = vmatprep.subr.mxu0 0.0
    %464 = vmatpush1.msra.mxu0 %v418
    %465 = vmatprep.subr.mxu0 0.0
    %466 = vmatpush1.msra.mxu0 %v417
    %467 = vmatprep.subr.mxu0 0.0
    %468 = vmatpush1.msra.mxu0 %v416
    %469 = vmatprep.subr.mxu0 0.0
    %470 = vmatpush1.msra.mxu0 %v415
    %471 = vmatprep.subr.mxu0 0.0
    %472 = vmatpush1.msra.mxu0 %v414
    %473 = vmatprep.subr.mxu0 0.0
    %474 = vmatpush1.msra.mxu0 %v413
    %475 = vmatprep.subr.mxu0 0.0
    %476 = vmatpush1.msra.mxu0 %v412
    %477 = vmatprep.subr.mxu0 0.0
    %478 = vmatpush1.msra.mxu0 %v411
    %479 = vmatprep.subr.mxu0 0.0
    %480 = vmatpush1.msra.mxu0 %v410
    %481 = vmatprep.subr.mxu0 0.0
    %482 = vmatpush2.msra.mxu0 %v441
    %483 = vmatprep.subr.mxu0 0.0
    %484 = vmatpush2.msra.mxu0 %v440
    %485 = vmatprep.subr.mxu0 0.0
    %486 = vmatpush2.msra.mxu0 %v439
    %487 = vmatprep.subr.mxu0 0.0
    %488 = vmatpush2.msra.mxu0 %v438
    %489 = vmatprep.subr.mxu0 0.0
    %490 = vmatpush2.msra.mxu0 %v437
    %491 = vmatprep.subr.mxu0 0.0
    %492 = vmatpush2.msra.mxu0 %v436
    %493 = vmatprep.subr.mxu0 0.0
    %494 = vmatpush2.msra.mxu0 %v435
    %495 = vmatprep.subr.mxu0 0.0
    %496 = vmatpush2.msra.mxu0 %v434
    %497 = vmatprep.subr.mxu0 0.0
    %498 = vmatpush2.msra.mxu0 %v433
    %499 = vmatprep.subr.mxu0 0.0
    %500 = vmatpush2.msra.mxu0 %v432
    %501 = vmatprep.subr.mxu0 0.0
    %502 = vmatpush2.msra.mxu0 %v431
    %503 = vmatprep.subr.mxu0 0.0
    %504 = vmatpush2.msra.mxu0 %v430
    %505 = vmatprep.subr.mxu0 0.0
    %506 = vmatpush2.msra.mxu0 %v429
    %507 = vmatprep.subr.mxu0 0.0
    %508 = vmatpush2.msra.mxu0 %v428
    %509 = vmatprep.subr.mxu0 0.0
    %510 = vmatpush2.msra.mxu0 %v427
    %511 = vmatprep.subr.mxu0 0.0
    %512 = vmatpush2.msra.mxu0 %v426
    %513 = vmatprep.mubr.f32.mxu0 %v409
    %514 = vmatmul.mubr.f32.gmra.mxu0 %v408
    %v515 = vpop.f32.mrf.mxu0
    %v516 = vadd.f32 %v447, %v515
    %v517 = vpop.f32.mrf.mxu0
    %518 = vdwg.mxu0
    %v519 = vmax.f32 %v516, 0.0
    %v520 = vld [vmem:[#allocation13] sm:$0xff]
    %v521 = vld [vmem:[#allocation13 + $0x8] sm:$0xff]
    %v522 = vld [vmem:[#allocation13 + $0x10] sm:$0xff]
    %v523 = vld [vmem:[#allocation13 + $0x18] sm:$0xff]
    %v524 = vld [vmem:[#allocation13 + $0x20] sm:$0xff]
    %v525 = vld [vmem:[#allocation13 + $0x28] sm:$0xff]
    %v526 = vld [vmem:[#allocation13 + $0x30] sm:$0xff]
    %v527 = vld [vmem:[#allocation13 + $0x38] sm:$0xff]
    %v528 = vld [vmem:[#allocation13 + $0x40] sm:$0xff]
    %v529 = vld [vmem:[#allocation13 + $0x48] sm:$0xff]
    %v530 = vld [vmem:[#allocation13 + $0x50] sm:$0xff]
    %v531 = vld [vmem:[#allocation13 + $0x58] sm:$0xff]
    %v532 = vld [vmem:[#allocation13 + $0x60] sm:$0xff]
    %v533 = vld [vmem:[#allocation13 + $0x68] sm:$0xff]
    %v534 = vld [vmem:[#allocation13 + $0x70] sm:$0xff]
    %v535 = vld [vmem:[#allocation13 + $0x78] sm:$0xff]
    %v536 = vld [vmem:[%s10] sm:$0x1]
    %v538 = vlaneseq
    %v539 = vshrl.u32 %v538, 7
    %v540 = vsub.s32 0, %v539
    %v541 = vrot.slane %v536, %v540
    %543 = vmatprep.subr.mxu0 0.0
    %544 = vmatpush1.msra.mxu0 %v535
    %545 = vmatprep.subr.mxu0 0.0
    %546 = vmatpush1.msra.mxu0 %v534
    %547 = vmatprep.subr.mxu0 0.0
    %548 = vmatpush1.msra.mxu0 %v533
    %549 = vmatprep.subr.mxu0 0.0
    %550 = vmatpush1.msra.mxu0 %v532
    %551 = vmatprep.subr.mxu0 0.0
    %552 = vmatpush1.msra.mxu0 %v531
    %553 = vmatprep.subr.mxu0 0.0
    %554 = vmatpush1.msra.mxu0 %v530
    %555 = vmatprep.subr.mxu0 0.0
    %556 = vmatpush1.msra.mxu0 %v529
    %557 = vmatprep.subr.mxu0 0.0
    %558 = vmatpush1.msra.mxu0 %v528
    %559 = vmatprep.subr.mxu0 0.0
    %560 = vmatpush1.msra.mxu0 %v527
    %561 = vmatprep.subr.mxu0 0.0
    %562 = vmatpush1.msra.mxu0 %v526
    %563 = vmatprep.subr.mxu0 0.0
    %564 = vmatpush1.msra.mxu0 %v525
    %565 = vmatprep.subr.mxu0 0.0
    %566 = vmatpush1.msra.mxu0 %v524
    %567 = vmatprep.subr.mxu0 0.0
    %568 = vmatpush1.msra.mxu0 %v523
    %569 = vmatprep.subr.mxu0 0.0
    %570 = vmatpush1.msra.mxu0 %v522
    %571 = vmatprep.subr.mxu0 0.0
    %572 = vmatpush1.msra.mxu0 %v521
    %573 = vmatprep.subr.mxu0 0.0
    %574 = vmatpush1.msra.mxu0 %v520
    %575 = vmatprep.subr.mxu0 0.0
    %576 = vmatpush2.msra.mxu0 0.0
    %577 = vmatprep.subr.mxu0 0.0
    %578 = vmatpush2.msra.mxu0 0.0
    %579 = vmatprep.subr.mxu0 0.0
    %580 = vmatpush2.msra.mxu0 0.0
    %581 = vmatprep.subr.mxu0 0.0
    %582 = vmatpush2.msra.mxu0 0.0
    %583 = vmatprep.subr.mxu0 0.0
    %584 = vmatpush2.msra.mxu0 0.0
    %585 = vmatprep.subr.mxu0 0.0
    %586 = vmatpush2.msra.mxu0 0.0
    %587 = vmatprep.subr.mxu0 0.0
    %588 = vmatpush2.msra.mxu0 0.0
    %589 = vmatprep.subr.mxu0 0.0
    %590 = vmatpush2.msra.mxu0 0.0
    %591 = vmatprep.subr.mxu0 0.0
    %592 = vmatpush2.msra.mxu0 0.0
    %593 = vmatprep.subr.mxu0 0.0
    %594 = vmatpush2.msra.mxu0 0.0
    %595 = vmatprep.subr.mxu0 0.0
    %596 = vmatpush2.msra.mxu0 0.0
    %597 = vmatprep.subr.mxu0 0.0
    %598 = vmatpush2.msra.mxu0 0.0
    %599 = vmatprep.subr.mxu0 0.0
    %600 = vmatpush2.msra.mxu0 0.0
    %601 = vmatprep.subr.mxu0 0.0
    %602 = vmatpush2.msra.mxu0 0.0
    %603 = vmatprep.subr.mxu0 0.0
    %604 = vmatpush2.msra.mxu0 0.0
    %605 = vmatprep.subr.mxu0 0.0
    %606 = vmatpush2.msra.mxu0 0.0
    %607 = vmatprep.mubr.f32.mxu0 0.0
    %608 = vmatmul.mubr.f32.gmra.mxu0 %v519
    %v609 = vpop.f32.mrf.mxu0
    %v610 = vadd.f32 %v541, %v609
    %v611 = vpop.f32.mrf.mxu0
    %612 = vdwg.mxu0
    %613 = vst [vmem:[#allocation14] sm:$0xff] %v610
    // Predicated region
    $region74: #{tpu_custom_call.1} parent=1 // pred_check
      _
    $region75: #{tpu_custom_call.1} parent=1 // pred_check_branch
      %615 = sbr.rel (0) target = $region77
    $region76: #{tpu_custom_call.1} parent=1 // pred_region
      %s617 = ssub.s32 128, 128
      %618 = vsyncadd [#allocation4], %s617
      %s620 = sshll.u32 [#allocation14], 4
      %s621 = int_to_ptr.vmem [resolvable:$true] %s620
      %623 = dma.vmem_to_hbm [thread:$0]  %s621, 128, %s11, [#allocation4]
    $region77: #{tpu_custom_call.1} parent=1 // pred_fallthru
      _
    // Predicated region
    $region78: #{tpu_custom_call.1} parent=1 // pred_check
      _
    $region79: #{tpu_custom_call.1} parent=1 // pred_check_branch
      %625 = sbr.rel (0) target = $region81
    $region80: #{tpu_custom_call.1} parent=1 // pred_region
      %626 = dma.done [#allocation4], 128
    $region81: #{tpu_custom_call.1} parent=1 // pred_fallthru
      _
    %627 = vsyncpa [#allocation3], 1
    %628 = vsyncpa [#allocation6], 1
    %629 = vsyncpa [#allocation9], 1
    %630 = vsyncpa [#allocation12], 1
    %631 = vsyncpa [#allocation4], 1

</llo_original>
